<compile_context>
chip_gen: v5e
topology: v5e:2x2
jax: 0.10.0
libtpu: 0.0.40
codegen_flags: <defaults>
</compile_context>

<pallas_src>
import jax
import jax.numpy as jnp
from jax.experimental import pallas as pl
from jax.experimental.pallas import tpu as pltpu


# ---------------------------------------------------------------------------
# Fused Pallas kernel
# ---------------------------------------------------------------------------
def _planetoid_scn_kernel(a_ref,                          # [1]   PReLU slope (SMEM)
                          X0_ref,                         # [N0,F] raw node features
                          S1a_ref, S1b_ref,               # [N1,N0] one-hot edge selectors
                          S2a_ref, S2b_ref, S2c_ref,      # [N2,N0] one-hot tri selectors
                          L0_ref, L1_ref, L2_ref,         # dense Laplacians
                          B1_ref, B2_ref,                 # dense boundary matrices
                          Wn_ref, bn_ref, We_ref, be_ref, Wt_ref, bt_ref,
                          Wtri_ref, btri_ref,
                          out_ref):                       # [N0,out]
    f32 = jnp.float32
    a = a_ref[0]                                          # shared PReLU parameter

    def dot(x, y):
        return jnp.dot(x, y, preferred_element_type=f32)

    def prelu(x):                                         # F.prelu, single weight
        return jnp.where(x >= 0, x, a * x)

    # X0[X0 != 0] = 1
    X0 = (X0_ref[...] != 0).astype(f32)

    # Edge / triangle features: X0 is binary, so logical_and == product.
    # Row gathers X0[idx] are expressed as one-hot selector matmuls (MXU-friendly,
    # avoids data-dependent VMEM gathers).
    X1 = dot(S1a_ref[...], X0) * dot(S1b_ref[...], X0)
    X2 = dot(S2a_ref[...], X0) * dot(S2b_ref[...], X0) * dot(S2c_ref[...], X0)

    # SCNLayer(k=1): chebyshev(L, x, 1) == L @ x, then Linear; shared PReLU after.
    H0 = prelu(dot(dot(L0_ref[...], X0), Wn_ref[...]) + bn_ref[...])
    H1 = prelu(dot(dot(L1_ref[...], X1), We_ref[...]) + be_ref[...])
    H2 = prelu(dot(dot(L2_ref[...], X2), Wt_ref[...]) + bt_ref[...])

    # tri_layer(B2 @ H2)
    T = dot(dot(B2_ref[...], H2), Wtri_ref[...]) + btri_ref[...]

    # (H0 + B1 @ H1 + B1 @ T) / 3, reassociated to one B1 matmul.
    out_ref[...] = (H0 + dot(B1_ref[...], H1 + T)) * (1.0 / 3.0)


_VMEM = pl.BlockSpec(memory_space=pltpu.MemorySpace.VMEM)
_SMEM = pl.BlockSpec(memory_space=pltpu.MemorySpace.SMEM)


def _mm_flops(m, k, n):
    return 2 * m * k * n


def planetoid_scn_forward(params, X0, edge_index, tri_index, L0, L1, L2, B1, B2):
    """Single fused pallas_call implementing PlanetoidSCN.forward."""
    N0, F = X0.shape
    N1 = L1.shape[0]
    N2 = L2.shape[0]
    out_size = params["Wn"].shape[1]

    # Gather-as-matmul selection matrices (built once, wrapper side).
    eye = jnp.eye(N0, dtype=jnp.float32)
    S1a, S1b = eye[edge_index[:, 0]], eye[edge_index[:, 1]]
    S2a, S2b, S2c = eye[tri_index[:, 0]], eye[tri_index[:, 1]], eye[tri_index[:, 2]]

    a = params["prelu_a"].reshape(1).astype(jnp.float32)

    args = (a, X0, S1a, S1b, S2a, S2b, S2c, L0, L1, L2, B1, B2,
            params["Wn"], params["bn"], params["We"], params["be"],
            params["Wt"], params["bt"], params["Wtri"], params["btri"])

    flops = (2 * _mm_flops(N1, N0, F) + 3 * _mm_flops(N2, N0, F)
             + _mm_flops(N0, N0, F) + _mm_flops(N0, F, out_size)
             + _mm_flops(N1, N1, F) + _mm_flops(N1, F, out_size)
             + _mm_flops(N2, N2, F) + _mm_flops(N2, F, out_size)
             + _mm_flops(N1, N2, out_size) + _mm_flops(N1, out_size, out_size)
             + _mm_flops(N0, N1, out_size))
    bytes_accessed = int(sum(int(x.size) * x.dtype.itemsize for x in args)
                         + N0 * out_size * 4)

    return pl.pallas_call(
        _planetoid_scn_kernel,
        out_shape=jax.ShapeDtypeStruct((N0, out_size), jnp.float32),
        in_specs=[_SMEM] + [_VMEM] * (len(args) - 1),
        out_specs=_VMEM,
        cost_estimate=pl.CostEstimate(flops=int(flops), transcendentals=0,
                                      bytes_accessed=bytes_accessed),
    )(*args)


# ---------------------------------------------------------------------------
# Pure-JAX reference (exact PyTorch formula, for correctness checking)
# ---------------------------------------------------------------------------
def ref_forward(params, X0, edge_index, tri_index, L0, L1, L2, B1, B2):
    a = params["prelu_a"][0]

    def prelu(x):
        return jnp.where(x >= 0, x, a * x)

    X0b = (X0 != 0).astype(jnp.float32)
    X1 = X0b[edge_index[:, 0]] * X0b[edge_index[:, 1]]                # logical_and
    X2 = X0b[tri_index[:, 0]] * X0b[tri_index[:, 1]] * X0b[tri_index[:, 2]]
    H0 = prelu((L0 @ X0b) @ params["Wn"] + params["bn"])
    H1 = prelu((L1 @ X1) @ params["We"] + params["be"])
    H2 = prelu((L2 @ X2) @ params["Wt"] + params["bt"])
    T = (B2 @ H2) @ params["Wtri"] + params["btri"]
    return (H0 + B1 @ H1 + B1 @ T) / 3.0


# ---------------------------------------------------------------------------
# Main
# ---------------------------------------------------------------------------
if __name__ == "__main__":
    key = jax.random.PRNGKey(0)

    # Model hyperparameters (PlanetoidSCN.__init__)
    num_node_feats = 4
    output_size = 8

    # Small synthetic simplicial complex
    N0, N1, N2 = 16, 24, 8     # nodes, edges, triangles

    keys = jax.random.split(key, 16)
    ki = iter(keys)

    # Node features with a mix of zero / nonzero entries (binarization matters)
    dense = jax.random.normal(next(ki), (N0, num_node_feats), jnp.float32)
    mask = jax.random.uniform(next(ki), (N0, num_node_feats)) < 0.6
    X0 = jnp.where(mask, dense, 0.0)

    # In the Planetoid setting, edge/triangle "features" start as node-index tuples
    edge_index = jax.random.randint(next(ki), (N1, 2), 0, N0, jnp.int32)
    tri_index = jax.random.randint(next(ki), (N2, 3), 0, N0, jnp.int32)

    # Dense symmetric Laplacians
    def rand_lap(k, n):
        m = jax.random.normal(k, (n, n), jnp.float32) * 0.1
        return 0.5 * (m + m.T)

    L0, L1, L2 = rand_lap(next(ki), N0), rand_lap(next(ki), N1), rand_lap(next(ki), N2)

    # Dense stand-ins for the sparse boundary matrices B1 [N0,N1], B2 [N1,N2]
    B1 = jax.random.randint(next(ki), (N0, N1), -1, 2).astype(jnp.float32)
    B2 = jax.random.randint(next(ki), (N1, N2), -1, 2).astype(jnp.float32)

    # PyTorch-Linear-style init; W pre-transposed to [in, out], bias [1, out]
    def make_linear(k, fan_in, fan_out):
        kw, kb = jax.random.split(k)
        bound = 1.0 / jnp.sqrt(jnp.float32(fan_in))
        W = jax.random.uniform(kw, (fan_in, fan_out), jnp.float32, -bound, bound)
        b = jax.random.uniform(kb, (1, fan_out), jnp.float32, -bound, bound)
        return W, b

    Wn, bn = make_linear(next(ki), num_node_feats, output_size)
    We, be = make_linear(next(ki), num_node_feats, output_size)
    Wt, bt = make_linear(next(ki), num_node_feats, output_size)
    Wtri, btri = make_linear(next(ki), output_size, output_size)

    params = dict(Wn=Wn, bn=bn, We=We, be=be, Wt=Wt, bt=bt,
                  Wtri=Wtri, btri=btri,
                  prelu_a=jnp.array([0.25], jnp.float32))   # nn.PReLU() default init

    # ---- Run the fused Pallas kernel ----
    out = planetoid_scn_forward(params, X0, edge_index, tri_index, L0, L1, L2, B1, B2)
    out = jax.block_until_ready(out)

    # ---- Check against pure-JAX reference ----
    ref = ref_forward(params, X0, edge_index, tri_index, L0, L1, L2, B1, B2)
    assert out.shape == (N0, output_size)
    assert jnp.allclose(out, ref, atol=1e-4, rtol=1e-4), (out, ref)

    print("KERNEL_OK")
</pallas_src>

<mosaic_0001>
module attributes {stable_mosaic.version = 11 : i64} {
  func.func @_planetoid_scn_kernel(%arg0: memref<1xf32, #tpu.memory_space<smem>>, %arg1: memref<16x4xf32, #tpu.memory_space<vmem>>, %arg2: memref<24x16xf32, #tpu.memory_space<vmem>>, %arg3: memref<24x16xf32, #tpu.memory_space<vmem>>, %arg4: memref<8x16xf32, #tpu.memory_space<vmem>>, %arg5: memref<8x16xf32, #tpu.memory_space<vmem>>, %arg6: memref<8x16xf32, #tpu.memory_space<vmem>>, %arg7: memref<16x16xf32, #tpu.memory_space<vmem>>, %arg8: memref<24x24xf32, #tpu.memory_space<vmem>>, %arg9: memref<8x8xf32, #tpu.memory_space<vmem>>, %arg10: memref<16x24xf32, #tpu.memory_space<vmem>>, %arg11: memref<24x8xf32, #tpu.memory_space<vmem>>, %arg12: memref<4x8xf32, #tpu.memory_space<vmem>>, %arg13: memref<1x8xf32, #tpu.memory_space<vmem>>, %arg14: memref<4x8xf32, #tpu.memory_space<vmem>>, %arg15: memref<1x8xf32, #tpu.memory_space<vmem>>, %arg16: memref<4x8xf32, #tpu.memory_space<vmem>>, %arg17: memref<1x8xf32, #tpu.memory_space<vmem>>, %arg18: memref<8x8xf32, #tpu.memory_space<vmem>>, %arg19: memref<1x8xf32, #tpu.memory_space<vmem>>, %arg20: memref<16x8xf32, #tpu.memory_space<vmem>>) attributes {dimension_semantics = [], scalar_prefetch = 0 : i64, scratch_operands = 0 : i64, tpu.core_type = #tpu.core_type<tc>} {
    %c0 = arith.constant 0 : index
    %0 = memref.load %arg0[%c0] : memref<1xf32, #tpu.memory_space<smem>>
    %c0_0 = arith.constant 0 : index
    %c0_1 = arith.constant 0 : index
    %1 = vector.load %arg1[%c0_0, %c0_1] : memref<16x4xf32, #tpu.memory_space<vmem>>, vector<16x4xf32>
    %cst = arith.constant 0.000000e+00 : f32
    %2 = vector.broadcast %cst : f32 to vector<16x4xf32>
    %3 = arith.cmpf one, %1, %2 : vector<16x4xf32>
    %4 = arith.extui %3 : vector<16x4xi1> to vector<16x4xi32>
    %5 = arith.sitofp %4 : vector<16x4xi32> to vector<16x4xf32>
    %c0_2 = arith.constant 0 : index
    %c0_3 = arith.constant 0 : index
    %6 = vector.load %arg2[%c0_2, %c0_3] : memref<24x16xf32, #tpu.memory_space<vmem>>, vector<24x16xf32>
    %cst_4 = arith.constant dense<0.000000e+00> : vector<24x4xf32>
    %7 = tpu.matmul %6, %5, %cst_4 {dimension_numbers = #tpu.dot_dimension_numbers<[1], [0], [0], [1], [0, 0, 1, 1], [], []>} : vector<24x16xf32>, vector<16x4xf32>, vector<24x4xf32> -> vector<24x4xf32>
    %c0_5 = arith.constant 0 : index
    %c0_6 = arith.constant 0 : index
    %8 = vector.load %arg3[%c0_5, %c0_6] : memref<24x16xf32, #tpu.memory_space<vmem>>, vector<24x16xf32>
    %cst_7 = arith.constant dense<0.000000e+00> : vector<24x4xf32>
    %9 = tpu.matmul %8, %5, %cst_7 {dimension_numbers = #tpu.dot_dimension_numbers<[1], [0], [0], [1], [0, 0, 1, 1], [], []>} : vector<24x16xf32>, vector<16x4xf32>, vector<24x4xf32> -> vector<24x4xf32>
    %10 = arith.mulf %7, %9 : vector<24x4xf32>
    %c0_8 = arith.constant 0 : index
    %c0_9 = arith.constant 0 : index
    %11 = vector.load %arg4[%c0_8, %c0_9] : memref<8x16xf32, #tpu.memory_space<vmem>>, vector<8x16xf32>
    %cst_10 = arith.constant dense<0.000000e+00> : vector<8x4xf32>
    %12 = tpu.matmul %11, %5, %cst_10 {dimension_numbers = #tpu.dot_dimension_numbers<[1], [0], [0], [1], [0, 0, 1, 1], [], []>} : vector<8x16xf32>, vector<16x4xf32>, vector<8x4xf32> -> vector<8x4xf32>
    %c0_11 = arith.constant 0 : index
    %c0_12 = arith.constant 0 : index
    %13 = vector.load %arg5[%c0_11, %c0_12] : memref<8x16xf32, #tpu.memory_space<vmem>>, vector<8x16xf32>
    %cst_13 = arith.constant dense<0.000000e+00> : vector<8x4xf32>
    %14 = tpu.matmul %13, %5, %cst_13 {dimension_numbers = #tpu.dot_dimension_numbers<[1], [0], [0], [1], [0, 0, 1, 1], [], []>} : vector<8x16xf32>, vector<16x4xf32>, vector<8x4xf32> -> vector<8x4xf32>
    %15 = arith.mulf %12, %14 : vector<8x4xf32>
    %c0_14 = arith.constant 0 : index
    %c0_15 = arith.constant 0 : index
    %16 = vector.load %arg6[%c0_14, %c0_15] : memref<8x16xf32, #tpu.memory_space<vmem>>, vector<8x16xf32>
    %cst_16 = arith.constant dense<0.000000e+00> : vector<8x4xf32>
    %17 = tpu.matmul %16, %5, %cst_16 {dimension_numbers = #tpu.dot_dimension_numbers<[1], [0], [0], [1], [0, 0, 1, 1], [], []>} : vector<8x16xf32>, vector<16x4xf32>, vector<8x4xf32> -> vector<8x4xf32>
    %18 = arith.mulf %15, %17 : vector<8x4xf32>
    %c0_17 = arith.constant 0 : index
    %c0_18 = arith.constant 0 : index
    %19 = vector.load %arg7[%c0_17, %c0_18] : memref<16x16xf32, #tpu.memory_space<vmem>>, vector<16x16xf32>
    %cst_19 = arith.constant dense<0.000000e+00> : vector<16x4xf32>
    %20 = tpu.matmul %19, %5, %cst_19 {dimension_numbers = #tpu.dot_dimension_numbers<[1], [0], [0], [1], [0, 0, 1, 1], [], []>} : vector<16x16xf32>, vector<16x4xf32>, vector<16x4xf32> -> vector<16x4xf32>
    %c0_20 = arith.constant 0 : index
    %c0_21 = arith.constant 0 : index
    %21 = vector.load %arg12[%c0_20, %c0_21] : memref<4x8xf32, #tpu.memory_space<vmem>>, vector<4x8xf32>
    %cst_22 = arith.constant dense<0.000000e+00> : vector<16x8xf32>
    %22 = tpu.matmul %20, %21, %cst_22 {dimension_numbers = #tpu.dot_dimension_numbers<[1], [0], [0], [1], [0, 0, 1, 1], [], []>} : vector<16x4xf32>, vector<4x8xf32>, vector<16x8xf32> -> vector<16x8xf32>
    %c0_23 = arith.constant 0 : index
    %c0_24 = arith.constant 0 : index
    %23 = vector.load %arg13[%c0_23, %c0_24] : memref<1x8xf32, #tpu.memory_space<vmem>>, vector<1x8xf32>
    %24 = vector.broadcast %23 : vector<1x8xf32> to vector<16x8xf32>
    %25 = arith.addf %22, %24 : vector<16x8xf32>
    %cst_25 = arith.constant 0.000000e+00 : f32
    %26 = vector.broadcast %cst_25 : f32 to vector<16x8xf32>
    %27 = arith.cmpf oge, %25, %26 : vector<16x8xf32>
    %28 = vector.broadcast %0 : f32 to vector<16x8xf32>
    %29 = arith.mulf %28, %25 : vector<16x8xf32>
    %30 = arith.select %27, %25, %29 : vector<16x8xi1>, vector<16x8xf32>
    %c0_26 = arith.constant 0 : index
    %c0_27 = arith.constant 0 : index
    %31 = vector.load %arg8[%c0_26, %c0_27] : memref<24x24xf32, #tpu.memory_space<vmem>>, vector<24x24xf32>
    %cst_28 = arith.constant dense<0.000000e+00> : vector<24x4xf32>
    %32 = tpu.matmul %31, %10, %cst_28 {dimension_numbers = #tpu.dot_dimension_numbers<[1], [0], [0], [1], [0, 0, 1, 1], [], []>} : vector<24x24xf32>, vector<24x4xf32>, vector<24x4xf32> -> vector<24x4xf32>
    %c0_29 = arith.constant 0 : index
    %c0_30 = arith.constant 0 : index
    %33 = vector.load %arg14[%c0_29, %c0_30] : memref<4x8xf32, #tpu.memory_space<vmem>>, vector<4x8xf32>
    %cst_31 = arith.constant dense<0.000000e+00> : vector<24x8xf32>
    %34 = tpu.matmul %32, %33, %cst_31 {dimension_numbers = #tpu.dot_dimension_numbers<[1], [0], [0], [1], [0, 0, 1, 1], [], []>} : vector<24x4xf32>, vector<4x8xf32>, vector<24x8xf32> -> vector<24x8xf32>
    %c0_32 = arith.constant 0 : index
    %c0_33 = arith.constant 0 : index
    %35 = vector.load %arg15[%c0_32, %c0_33] : memref<1x8xf32, #tpu.memory_space<vmem>>, vector<1x8xf32>
    %36 = vector.broadcast %35 : vector<1x8xf32> to vector<24x8xf32>
    %37 = arith.addf %34, %36 : vector<24x8xf32>
    %cst_34 = arith.constant 0.000000e+00 : f32
    %38 = vector.broadcast %cst_34 : f32 to vector<24x8xf32>
    %39 = arith.cmpf oge, %37, %38 : vector<24x8xf32>
    %40 = vector.broadcast %0 : f32 to vector<24x8xf32>
    %41 = arith.mulf %40, %37 : vector<24x8xf32>
    %42 = arith.select %39, %37, %41 : vector<24x8xi1>, vector<24x8xf32>
    %c0_35 = arith.constant 0 : index
    %c0_36 = arith.constant 0 : index
    %43 = vector.load %arg9[%c0_35, %c0_36] : memref<8x8xf32, #tpu.memory_space<vmem>>, vector<8x8xf32>
    %cst_37 = arith.constant dense<0.000000e+00> : vector<8x4xf32>
    %44 = tpu.matmul %43, %18, %cst_37 {dimension_numbers = #tpu.dot_dimension_numbers<[1], [0], [0], [1], [0, 0, 1, 1], [], []>} : vector<8x8xf32>, vector<8x4xf32>, vector<8x4xf32> -> vector<8x4xf32>
    %c0_38 = arith.constant 0 : index
    %c0_39 = arith.constant 0 : index
    %45 = vector.load %arg16[%c0_38, %c0_39] : memref<4x8xf32, #tpu.memory_space<vmem>>, vector<4x8xf32>
    %cst_40 = arith.constant dense<0.000000e+00> : vector<8x8xf32>
    %46 = tpu.matmul %44, %45, %cst_40 {dimension_numbers = #tpu.dot_dimension_numbers<[1], [0], [0], [1], [0, 0, 1, 1], [], []>} : vector<8x4xf32>, vector<4x8xf32>, vector<8x8xf32> -> vector<8x8xf32>
    %c0_41 = arith.constant 0 : index
    %c0_42 = arith.constant 0 : index
    %47 = vector.load %arg17[%c0_41, %c0_42] : memref<1x8xf32, #tpu.memory_space<vmem>>, vector<1x8xf32>
    %48 = vector.broadcast %47 : vector<1x8xf32> to vector<8x8xf32>
    %49 = arith.addf %46, %48 : vector<8x8xf32>
    %cst_43 = arith.constant 0.000000e+00 : f32
    %50 = vector.broadcast %cst_43 : f32 to vector<8x8xf32>
    %51 = arith.cmpf oge, %49, %50 : vector<8x8xf32>
    %52 = vector.broadcast %0 : f32 to vector<8x8xf32>
    %53 = arith.mulf %52, %49 : vector<8x8xf32>
    %54 = arith.select %51, %49, %53 : vector<8x8xi1>, vector<8x8xf32>
    %c0_44 = arith.constant 0 : index
    %c0_45 = arith.constant 0 : index
    %55 = vector.load %arg11[%c0_44, %c0_45] : memref<24x8xf32, #tpu.memory_space<vmem>>, vector<24x8xf32>
    %cst_46 = arith.constant dense<0.000000e+00> : vector<24x8xf32>
    %56 = tpu.matmul %55, %54, %cst_46 {dimension_numbers = #tpu.dot_dimension_numbers<[1], [0], [0], [1], [0, 0, 1, 1], [], []>} : vector<24x8xf32>, vector<8x8xf32>, vector<24x8xf32> -> vector<24x8xf32>
    %c0_47 = arith.constant 0 : index
    %c0_48 = arith.constant 0 : index
    %57 = vector.load %arg18[%c0_47, %c0_48] : memref<8x8xf32, #tpu.memory_space<vmem>>, vector<8x8xf32>
    %cst_49 = arith.constant dense<0.000000e+00> : vector<24x8xf32>
    %58 = tpu.matmul %56, %57, %cst_49 {dimension_numbers = #tpu.dot_dimension_numbers<[1], [0], [0], [1], [0, 0, 1, 1], [], []>} : vector<24x8xf32>, vector<8x8xf32>, vector<24x8xf32> -> vector<24x8xf32>
    %c0_50 = arith.constant 0 : index
    %c0_51 = arith.constant 0 : index
    %59 = vector.load %arg19[%c0_50, %c0_51] : memref<1x8xf32, #tpu.memory_space<vmem>>, vector<1x8xf32>
    %60 = vector.broadcast %59 : vector<1x8xf32> to vector<24x8xf32>
    %61 = arith.addf %58, %60 : vector<24x8xf32>
    %c0_52 = arith.constant 0 : index
    %c0_53 = arith.constant 0 : index
    %62 = vector.load %arg10[%c0_52, %c0_53] : memref<16x24xf32, #tpu.memory_space<vmem>>, vector<16x24xf32>
    %63 = arith.addf %42, %61 : vector<24x8xf32>
    %cst_54 = arith.constant dense<0.000000e+00> : vector<16x8xf32>
    %64 = tpu.matmul %62, %63, %cst_54 {dimension_numbers = #tpu.dot_dimension_numbers<[1], [0], [0], [1], [0, 0, 1, 1], [], []>} : vector<16x24xf32>, vector<24x8xf32>, vector<16x8xf32> -> vector<16x8xf32>
    %65 = arith.addf %30, %64 : vector<16x8xf32>
    %cst_55 = arith.constant 0.333333343 : f32
    %66 = vector.broadcast %cst_55 : f32 to vector<16x8xf32>
    %67 = arith.mulf %65, %66 : vector<16x8xf32>
    %c0_56 = arith.constant 0 : index
    %c0_57 = arith.constant 0 : index
    %68 = vector.load %arg20[%c0_56, %c0_57] : memref<16x8xf32, #tpu.memory_space<vmem>>, vector<16x8xf32>
    tpu.vector_store %arg20[%c0_56, %c0_57], %67 {strides = array<i32>} : memref<16x8xf32, #tpu.memory_space<vmem>>, vector<16x8xf32>,
    return
  }
}

</mosaic_0001>

<llo_original>
// kernel: tpu_custom_call.1
$region0: #{tpu_custom_call.1}
  #allocation0 [shape = 'u32[]', space=smem, size = 0x4, offset = 0x4, fixed_abs, tag = 'smem constant byte address 0x4 - core index']
  #allocation1 [shape = 'u32[72,128]{1,0:T(1,128)}', space=vmem, size = 0x9000, scoped, tag = 'internal scratch']
  #allocation2 [shape = 'f32[1]{0:T(128)S(6)}', space=smem, size = 0x200, scoped, tag = 'scoped memory for tpu_custom_call.1']
  %s0 = inlined_call_operand.<no memory space> [shape: f32[1], index: 0, kind: input, shape index: {}]
  %s1 = inlined_call_operand.vmem [shape: f32[16,4], index: 1, kind: input, shape index: {}]
  %s2 = inlined_call_operand.vmem [shape: f32[24,16], index: 2, kind: input, shape index: {}]
  %s3 = inlined_call_operand.vmem [shape: f32[24,16], index: 3, kind: input, shape index: {}]
  %s4 = inlined_call_operand.vmem [shape: f32[8,16], index: 4, kind: input, shape index: {}]
  %s5 = inlined_call_operand.vmem [shape: f32[8,16], index: 5, kind: input, shape index: {}]
  %s6 = inlined_call_operand.vmem [shape: f32[8,16], index: 6, kind: input, shape index: {}]
  %s7 = inlined_call_operand.vmem [shape: f32[16,16], index: 7, kind: input, shape index: {}]
  %s8 = inlined_call_operand.vmem [shape: f32[24,24], index: 8, kind: input, shape index: {}]
  %s9 = inlined_call_operand.vmem [shape: f32[8,8], index: 9, kind: input, shape index: {}]
  %s10 = inlined_call_operand.vmem [shape: f32[16,24], index: 10, kind: input, shape index: {}]
  %s11 = inlined_call_operand.vmem [shape: f32[24,8], index: 11, kind: input, shape index: {}]
  %s12 = inlined_call_operand.vmem [shape: f32[4,8], index: 12, kind: input, shape index: {}]
  %s13 = inlined_call_operand.vmem [shape: f32[1,8], index: 13, kind: input, shape index: {}]
  %s14 = inlined_call_operand.vmem [shape: f32[4,8], index: 14, kind: input, shape index: {}]
  %s15 = inlined_call_operand.vmem [shape: f32[1,8], index: 15, kind: input, shape index: {}]
  %s16 = inlined_call_operand.hbm [shape: f32[4,8], index: 16, kind: input, shape index: {}]
  %s17 = inlined_call_operand.vmem [shape: f32[1,8], index: 17, kind: input, shape index: {}]
  %s18 = inlined_call_operand.vmem [shape: f32[8,8], index: 18, kind: input, shape index: {}]
  %s19 = inlined_call_operand.vmem [shape: f32[1,8], index: 19, kind: input, shape index: {}]
  %s20 = inlined_call_operand.vmem [shape: f32[16,8], index: 20, kind: output, shape index: {}]
  %s21 = sld [smem:[#allocation0]]
  $region94: #{tpu_custom_call.1} parent=0
    _
  %s23 = ssub.s32 1, %s21
  %s24 = scalar_select 0, %s23, %s21
  %25 = sst [smem:[#allocation2]] %s0
  $region1: #{tpu_custom_call.1} parent=0
    #allocation3 [shape = 'u8[2048]{0}', space=vmem, size = 0x800, scoped, tag = 'input window, operand 16, single buffered']
    #allocation4 [shape = 's32[1]{0}', space=sflag, size = 0x4, scoped, tag = 'scoped memory for tpu_custom_call.1']
    %26 = vsyncpa [#allocation4], 0
    // Predicated region
    $region2: #{tpu_custom_call.1} parent=1 // pred_check
      _
    $region3: #{tpu_custom_call.1} parent=1 // pred_check_branch
      %28 = sbr.rel (0) target = $region5
    $region4: #{tpu_custom_call.1} parent=1 // pred_region
      _
    $region5: #{tpu_custom_call.1} parent=1 // pred_fallthru
      _
    // Predicated region
    $region6: #{tpu_custom_call.1} parent=1 // pred_check
      _
    $region7: #{tpu_custom_call.1} parent=1 // pred_check_branch
      %30 = sbr.rel (0) target = $region9
    $region8: #{tpu_custom_call.1} parent=1 // pred_region
      _
    $region9: #{tpu_custom_call.1} parent=1 // pred_fallthru
      _
    // Predicated region
    $region10: #{tpu_custom_call.1} parent=1 // pred_check
      _
    $region11: #{tpu_custom_call.1} parent=1 // pred_check_branch
      %32 = sbr.rel (0) target = $region13
    $region12: #{tpu_custom_call.1} parent=1 // pred_region
      _
    $region13: #{tpu_custom_call.1} parent=1 // pred_fallthru
      _
    // Predicated region
    $region14: #{tpu_custom_call.1} parent=1 // pred_check
      _
    $region15: #{tpu_custom_call.1} parent=1 // pred_check_branch
      %34 = sbr.rel (0) target = $region17
    $region16: #{tpu_custom_call.1} parent=1 // pred_region
      _
    $region17: #{tpu_custom_call.1} parent=1 // pred_fallthru
      _
    // Predicated region
    $region18: #{tpu_custom_call.1} parent=1 // pred_check
      _
    $region19: #{tpu_custom_call.1} parent=1 // pred_check_branch
      %36 = sbr.rel (0) target = $region21
    $region20: #{tpu_custom_call.1} parent=1 // pred_region
      _
    $region21: #{tpu_custom_call.1} parent=1 // pred_fallthru
      _
    // Predicated region
    $region22: #{tpu_custom_call.1} parent=1 // pred_check
      _
    $region23: #{tpu_custom_call.1} parent=1 // pred_check_branch
      %38 = sbr.rel (0) target = $region25
    $region24: #{tpu_custom_call.1} parent=1 // pred_region
      _
    $region25: #{tpu_custom_call.1} parent=1 // pred_fallthru
      _
    // Predicated region
    $region26: #{tpu_custom_call.1} parent=1 // pred_check
      _
    $region27: #{tpu_custom_call.1} parent=1 // pred_check_branch
      %40 = sbr.rel (0) target = $region29
    $region28: #{tpu_custom_call.1} parent=1 // pred_region
      _
    $region29: #{tpu_custom_call.1} parent=1 // pred_fallthru
      _
    // Predicated region
    $region30: #{tpu_custom_call.1} parent=1 // pred_check
      _
    $region31: #{tpu_custom_call.1} parent=1 // pred_check_branch
      %42 = sbr.rel (0) target = $region33
    $region32: #{tpu_custom_call.1} parent=1 // pred_region
      _
    $region33: #{tpu_custom_call.1} parent=1 // pred_fallthru
      _
    // Predicated region
    $region34: #{tpu_custom_call.1} parent=1 // pred_check
      _
    $region35: #{tpu_custom_call.1} parent=1 // pred_check_branch
      %44 = sbr.rel (0) target = $region37
    $region36: #{tpu_custom_call.1} parent=1 // pred_region
      _
    $region37: #{tpu_custom_call.1} parent=1 // pred_fallthru
      _
    // Predicated region
    $region38: #{tpu_custom_call.1} parent=1 // pred_check
      _
    $region39: #{tpu_custom_call.1} parent=1 // pred_check_branch
      %46 = sbr.rel (0) target = $region41
    $region40: #{tpu_custom_call.1} parent=1 // pred_region
      _
    $region41: #{tpu_custom_call.1} parent=1 // pred_fallthru
      _
    // Predicated region
    $region42: #{tpu_custom_call.1} parent=1 // pred_check
      _
    $region43: #{tpu_custom_call.1} parent=1 // pred_check_branch
      %48 = sbr.rel (0) target = $region45
    $region44: #{tpu_custom_call.1} parent=1 // pred_region
      _
    $region45: #{tpu_custom_call.1} parent=1 // pred_fallthru
      _
    // Predicated region
    $region46: #{tpu_custom_call.1} parent=1 // pred_check
      _
    $region47: #{tpu_custom_call.1} parent=1 // pred_check_branch
      %50 = sbr.rel (0) target = $region49
    $region48: #{tpu_custom_call.1} parent=1 // pred_region
      _
    $region49: #{tpu_custom_call.1} parent=1 // pred_fallthru
      _
    // Predicated region
    $region50: #{tpu_custom_call.1} parent=1 // pred_check
      _
    $region51: #{tpu_custom_call.1} parent=1 // pred_check_branch
      %52 = sbr.rel (0) target = $region53
    $region52: #{tpu_custom_call.1} parent=1 // pred_region
      _
    $region53: #{tpu_custom_call.1} parent=1 // pred_fallthru
      _
    // Predicated region
    $region54: #{tpu_custom_call.1} parent=1 // pred_check
      _
    $region55: #{tpu_custom_call.1} parent=1 // pred_check_branch
      %54 = sbr.rel (0) target = $region57
    $region56: #{tpu_custom_call.1} parent=1 // pred_region
      _
    $region57: #{tpu_custom_call.1} parent=1 // pred_fallthru
      _
    // Predicated region
    $region58: #{tpu_custom_call.1} parent=1 // pred_check
      _
    $region59: #{tpu_custom_call.1} parent=1 // pred_check_branch
      %56 = sbr.rel (0) target = $region61
    $region60: #{tpu_custom_call.1} parent=1 // pred_region
      _
    $region61: #{tpu_custom_call.1} parent=1 // pred_fallthru
      _
    // Predicated region
    $region62: #{tpu_custom_call.1} parent=1 // pred_check
      _
    $region63: #{tpu_custom_call.1} parent=1 // pred_check_branch
      %58 = sbr.rel (0) target = $region65
    $region64: #{tpu_custom_call.1} parent=1 // pred_region
      _
    $region65: #{tpu_custom_call.1} parent=1 // pred_fallthru
      _
    // Predicated region
    $region66: #{tpu_custom_call.1} parent=1 // pred_check
      _
    $region67: #{tpu_custom_call.1} parent=1 // pred_check_branch
      %60 = sbr.rel (0) target = $region69
    $region68: #{tpu_custom_call.1} parent=1 // pred_region
      %62 = vsyncadd [#allocation4], 0
      %s64 = sshll.u32 %s16, 4
      %s65 = int_to_ptr.hbm [resolvable:$true] %s64
      %s66 = sshll.u32 [#allocation3], 4
      %s67 = int_to_ptr.vmem [resolvable:$true] %s66
      %69 = dma.hbm_to_vmem [thread:$0]  %s65, 64, %s67, [#allocation4]
    $region69: #{tpu_custom_call.1} parent=1 // pred_fallthru
      _
    // Predicated region
    $region70: #{tpu_custom_call.1} parent=1 // pred_check
      _
    $region71: #{tpu_custom_call.1} parent=1 // pred_check_branch
      %71 = sbr.rel (0) target = $region73
    $region72: #{tpu_custom_call.1} parent=1 // pred_region
      _
    $region73: #{tpu_custom_call.1} parent=1 // pred_fallthru
      _
    // Predicated region
    $region74: #{tpu_custom_call.1} parent=1 // pred_check
      _
    $region75: #{tpu_custom_call.1} parent=1 // pred_check_branch
      %73 = sbr.rel (0) target = $region77
    $region76: #{tpu_custom_call.1} parent=1 // pred_region
      _
    $region77: #{tpu_custom_call.1} parent=1 // pred_fallthru
      _
    // Predicated region
    $region78: #{tpu_custom_call.1} parent=1 // pred_check
      _
    $region79: #{tpu_custom_call.1} parent=1 // pred_check_branch
      %75 = sbr.rel (0) target = $region81
    $region80: #{tpu_custom_call.1} parent=1 // pred_region
      _
    $region81: #{tpu_custom_call.1} parent=1 // pred_fallthru
      _
    // Predicated region
    $region82: #{tpu_custom_call.1} parent=1 // pred_check
      _
    $region83: #{tpu_custom_call.1} parent=1 // pred_check_branch
      %77 = sbr.rel (0) target = $region85
    $region84: #{tpu_custom_call.1} parent=1 // pred_region
      %79 = dma.done [#allocation4], 64
    $region85: #{tpu_custom_call.1} parent=1 // pred_fallthru
      _
    %s80 = sld [smem:[#allocation2]]
    %v81 = vld [vmem:[%s1] sm:$0xff]
    %v82 = vld [vmem:[%s1 + $0x8] sm:$0xff]
    %vm83 = vcmp.ne.f32.partialorder %v81, 0.0
    %vm84 = vcmp.ne.f32.partialorder %v82, 0.0
    %v85 = vsel %vm83, 1, 0
    %v86 = vsel %vm84, 1, 0
    %v87 = vcvt.s32.f32 %v85
    %v88 = vcvt.s32.f32 %v86
    %v89 = vld [vmem:[%s2] sm:$0xff]
    %v90 = vld [vmem:[%s2 + $0x8] sm:$0xff]
    %v91 = vld [vmem:[%s2 + $0x10] sm:$0xff]
    %vm92 = vcmask 130048
    %v94 = vsel %vm92, %v89, 0
    %v97 = vsel %vm92, %v90, 0
    %v100 = vsel %vm92, %v91, 0
    %102 = vmatpush.msra.mxu0 0.0
    %103 = vmatpush.msra.mxu0 0.0
    %104 = vmatpush.msra.mxu0 0.0
    %105 = vmatpush.msra.mxu0 0.0
    %106 = vmatpush.msra.mxu0 0.0
    %107 = vmatpush.msra.mxu0 0.0
    %108 = vmatpush.msra.mxu0 0.0
    %109 = vmatpush.msra.mxu0 0.0
    %110 = vmatpush.msra.mxu0 0.0
    %111 = vmatpush.msra.mxu0 0.0
    %112 = vmatpush.msra.mxu0 0.0
    %113 = vmatpush.msra.mxu0 0.0
    %114 = vmatpush.msra.mxu0 0.0
    %115 = vmatpush.msra.mxu0 0.0
    %116 = vmatpush.msra.mxu0 %v88
    %117 = vmatpush.msra.mxu0 %v87
    %118 = vmatmul.f32.gmra.mxu0 %v94
    %v119 = vpop.f32.mrf.mxu0
    %v120 = vadd.f32 0.0, %v119
    %121 = vmatmul.f32.gmra.mxu0 %v97
    %v122 = vpop.f32.mrf.mxu0
    %v123 = vadd.f32 0.0, %v122
    %124 = vmatmul.f32.gmra.mxu0 %v100
    %v125 = vpop.f32.mrf.mxu0
    %v126 = vadd.f32 0.0, %v125
    %127 = vdwg.mxu0
    %v128 = vld [vmem:[%s3] sm:$0xff]
    %v129 = vld [vmem:[%s3 + $0x8] sm:$0xff]
    %v130 = vld [vmem:[%s3 + $0x10] sm:$0xff]
    %v132 = vsel %vm92, %v128, 0
    %v135 = vsel %vm92, %v129, 0
    %v138 = vsel %vm92, %v130, 0
    %140 = vmatpush.msra.mxu0 0.0
    %141 = vmatpush.msra.mxu0 0.0
    %142 = vmatpush.msra.mxu0 0.0
    %143 = vmatpush.msra.mxu0 0.0
    %144 = vmatpush.msra.mxu0 0.0
    %145 = vmatpush.msra.mxu0 0.0
    %146 = vmatpush.msra.mxu0 0.0
    %147 = vmatpush.msra.mxu0 0.0
    %148 = vmatpush.msra.mxu0 0.0
    %149 = vmatpush.msra.mxu0 0.0
    %150 = vmatpush.msra.mxu0 0.0
    %151 = vmatpush.msra.mxu0 0.0
    %152 = vmatpush.msra.mxu0 0.0
    %153 = vmatpush.msra.mxu0 0.0
    %154 = vmatpush.msra.mxu0 %v88
    %155 = vmatpush.msra.mxu0 %v87
    %156 = vmatmul.f32.gmra.mxu0 %v132
    %v157 = vpop.f32.mrf.mxu0
    %v158 = vadd.f32 0.0, %v157
    %159 = vmatmul.f32.gmra.mxu0 %v135
    %v160 = vpop.f32.mrf.mxu0
    %v161 = vadd.f32 0.0, %v160
    %162 = vmatmul.f32.gmra.mxu0 %v138
    %v163 = vpop.f32.mrf.mxu0
    %v164 = vadd.f32 0.0, %v163
    %165 = vdwg.mxu0
    %v166 = vmul.f32 %v120, %v158
    %v167 = vmul.f32 %v123, %v161
    %v168 = vmul.f32 %v126, %v164
    %v169 = vld [vmem:[%s4] sm:$0xff]
    %v171 = vsel %vm92, %v169, 0
    %173 = vmatpush.msra.mxu0 0.0
    %174 = vmatpush.msra.mxu0 0.0
    %175 = vmatpush.msra.mxu0 0.0
    %176 = vmatpush.msra.mxu0 0.0
    %177 = vmatpush.msra.mxu0 0.0
    %178 = vmatpush.msra.mxu0 0.0
    %179 = vmatpush.msra.mxu0 0.0
    %180 = vmatpush.msra.mxu0 0.0
    %181 = vmatpush.msra.mxu0 0.0
    %182 = vmatpush.msra.mxu0 0.0
    %183 = vmatpush.msra.mxu0 0.0
    %184 = vmatpush.msra.mxu0 0.0
    %185 = vmatpush.msra.mxu0 0.0
    %186 = vmatpush.msra.mxu0 0.0
    %187 = vmatpush.msra.mxu0 %v88
    %188 = vmatpush.msra.mxu0 %v87
    %189 = vmatmul.f32.gmra.mxu0 %v171
    %v190 = vpop.f32.mrf.mxu0
    %v191 = vadd.f32 0.0, %v190
    %192 = vdwg.mxu0
    %v193 = vld [vmem:[%s5] sm:$0xff]
    %v195 = vsel %vm92, %v193, 0
    %197 = vmatpush.msra.mxu0 0.0
    %198 = vmatpush.msra.mxu0 0.0
    %199 = vmatpush.msra.mxu0 0.0
    %200 = vmatpush.msra.mxu0 0.0
    %201 = vmatpush.msra.mxu0 0.0
    %202 = vmatpush.msra.mxu0 0.0
    %203 = vmatpush.msra.mxu0 0.0
    %204 = vmatpush.msra.mxu0 0.0
    %205 = vmatpush.msra.mxu0 0.0
    %206 = vmatpush.msra.mxu0 0.0
    %207 = vmatpush.msra.mxu0 0.0
    %208 = vmatpush.msra.mxu0 0.0
    %209 = vmatpush.msra.mxu0 0.0
    %210 = vmatpush.msra.mxu0 0.0
    %211 = vmatpush.msra.mxu0 %v88
    %212 = vmatpush.msra.mxu0 %v87
    %213 = vmatmul.f32.gmra.mxu0 %v195
    %v214 = vpop.f32.mrf.mxu0
    %v215 = vadd.f32 0.0, %v214
    %216 = vdwg.mxu0
    %v217 = vmul.f32 %v191, %v215
    %v218 = vld [vmem:[%s6] sm:$0xff]
    %v220 = vsel %vm92, %v218, 0
    %222 = vmatpush.msra.mxu0 0.0
    %223 = vmatpush.msra.mxu0 0.0
    %224 = vmatpush.msra.mxu0 0.0
    %225 = vmatpush.msra.mxu0 0.0
    %226 = vmatpush.msra.mxu0 0.0
    %227 = vmatpush.msra.mxu0 0.0
    %228 = vmatpush.msra.mxu0 0.0
    %229 = vmatpush.msra.mxu0 0.0
    %230 = vmatpush.msra.mxu0 0.0
    %231 = vmatpush.msra.mxu0 0.0
    %232 = vmatpush.msra.mxu0 0.0
    %233 = vmatpush.msra.mxu0 0.0
    %234 = vmatpush.msra.mxu0 0.0
    %235 = vmatpush.msra.mxu0 0.0
    %236 = vmatpush.msra.mxu0 %v88
    %237 = vmatpush.msra.mxu0 %v87
    %238 = vmatmul.f32.gmra.mxu0 %v220
    %v239 = vpop.f32.mrf.mxu0
    %v240 = vadd.f32 0.0, %v239
    %241 = vdwg.mxu0
    %v242 = vmul.f32 %v217, %v240
    %v243 = vld [vmem:[%s7] sm:$0xff]
    %v244 = vld [vmem:[%s7 + $0x8] sm:$0xff]
    %v246 = vsel %vm92, %v243, 0
    %v249 = vsel %vm92, %v244, 0
    %251 = vmatpush.msra.mxu0 0.0
    %252 = vmatpush.msra.mxu0 0.0
    %253 = vmatpush.msra.mxu0 0.0
    %254 = vmatpush.msra.mxu0 0.0
    %255 = vmatpush.msra.mxu0 0.0
    %256 = vmatpush.msra.mxu0 0.0
    %257 = vmatpush.msra.mxu0 0.0
    %258 = vmatpush.msra.mxu0 0.0
    %259 = vmatpush.msra.mxu0 0.0
    %260 = vmatpush.msra.mxu0 0.0
    %261 = vmatpush.msra.mxu0 0.0
    %262 = vmatpush.msra.mxu0 0.0
    %263 = vmatpush.msra.mxu0 0.0
    %264 = vmatpush.msra.mxu0 0.0
    %265 = vmatpush.msra.mxu0 %v88
    %266 = vmatpush.msra.mxu0 %v87
    %267 = vmatmul.f32.gmra.mxu0 %v246
    %v268 = vpop.f32.mrf.mxu0
    %v269 = vadd.f32 0.0, %v268
    %270 = vmatmul.f32.gmra.mxu0 %v249
    %v271 = vpop.f32.mrf.mxu0
    %v272 = vadd.f32 0.0, %v271
    %273 = vdwg.mxu0
    %v274 = vld [vmem:[%s12] sm:$0xf]
    %v275 = vld [vmem:[%s13] sm:$0x1]
    %v277 = vperm.slane %v275, 0
    %vm279 = vcmask 31744
    %v281 = vsel %vm279, %v269, 0
    %v284 = vsel %vm279, %v272, 0
    %vm286 = vcmask 1043456
    %v288 = vsel %vm286, %v274, 0
    %290 = vmatpush.msra.mxu0 0.0
    %291 = vmatpush.msra.mxu0 0.0
    %292 = vmatpush.msra.mxu0 0.0
    %293 = vmatpush.msra.mxu0 0.0
    %294 = vmatpush.msra.mxu0 0.0
    %295 = vmatpush.msra.mxu0 0.0
    %296 = vmatpush.msra.mxu0 0.0
    %297 = vmatpush.msra.mxu0 0.0
    %298 = vmatpush.msra.mxu0 0.0
    %299 = vmatpush.msra.mxu0 0.0
    %300 = vmatpush.msra.mxu0 0.0
    %301 = vmatpush.msra.mxu0 0.0
    %302 = vmatpush.msra.mxu0 0.0
    %303 = vmatpush.msra.mxu0 0.0
    %304 = vmatpush.msra.mxu0 0.0
    %305 = vmatpush.msra.mxu0 %v288
    %306 = vmatmul.f32.gmra.mxu0 %v281
    %v307 = vpop.f32.mrf.mxu0
    %v308 = vadd.f32 %v277, %v307
    %309 = vmatmul.f32.gmra.mxu0 %v284
    %v310 = vpop.f32.mrf.mxu0
    %v311 = vadd.f32 %v277, %v310
    %312 = vdwg.mxu0
    %vm313 = vcmp.ge.f32.partialorder %v308, 0.0
    %vm314 = vcmp.ge.f32.partialorder %v311, 0.0
    %v315 = vstv %s80
    %v316 = vmul.f32 %v315, %v308
    %v317 = vmul.f32 %v315, %v311
    %v318 = vsel %vm313, %v308, %v316
    %v319 = vsel %vm314, %v311, %v317
    %v320 = vld [vmem:[%s8] sm:$0xff]
    %v321 = vld [vmem:[%s8 + $0x8] sm:$0xff]
    %v322 = vld [vmem:[%s8 + $0x10] sm:$0xff]
    %vm323 = vcmask 195584
    %v325 = vsel %vm323, %v320, 0
    %v328 = vsel %vm323, %v321, 0
    %v331 = vsel %vm323, %v322, 0
    %333 = vmatpush.msra.mxu0 0.0
    %334 = vmatpush.msra.mxu0 0.0
    %335 = vmatpush.msra.mxu0 0.0
    %336 = vmatpush.msra.mxu0 0.0
    %337 = vmatpush.msra.mxu0 0.0
    %338 = vmatpush.msra.mxu0 0.0
    %339 = vmatpush.msra.mxu0 0.0
    %340 = vmatpush.msra.mxu0 0.0
    %341 = vmatpush.msra.mxu0 0.0
    %342 = vmatpush.msra.mxu0 0.0
    %343 = vmatpush.msra.mxu0 0.0
    %344 = vmatpush.msra.mxu0 0.0
    %345 = vmatpush.msra.mxu0 0.0
    %346 = vmatpush.msra.mxu0 %v168
    %347 = vmatpush.msra.mxu0 %v167
    %348 = vmatpush.msra.mxu0 %v166
    %349 = vmatmul.f32.gmra.mxu0 %v325
    %v350 = vpop.f32.mrf.mxu0
    %v351 = vadd.f32 0.0, %v350
    %352 = vmatmul.f32.gmra.mxu0 %v328
    %v353 = vpop.f32.mrf.mxu0
    %v354 = vadd.f32 0.0, %v353
    %355 = vmatmul.f32.gmra.mxu0 %v331
    %v356 = vpop.f32.mrf.mxu0
    %v357 = vadd.f32 0.0, %v356
    %358 = vdwg.mxu0
    %v359 = vld [vmem:[%s14] sm:$0xf]
    %v360 = vld [vmem:[%s15] sm:$0x1]
    %v362 = vperm.slane %v360, 0
    %v365 = vsel %vm279, %v351, 0
    %v368 = vsel %vm279, %v354, 0
    %v371 = vsel %vm279, %v357, 0
    %v374 = vsel %vm286, %v359, 0
    %376 = vmatpush.msra.mxu0 0.0
    %377 = vmatpush.msra.mxu0 0.0
    %378 = vmatpush.msra.mxu0 0.0
    %379 = vmatpush.msra.mxu0 0.0
    %380 = vmatpush.msra.mxu0 0.0
    %381 = vmatpush.msra.mxu0 0.0
    %382 = vmatpush.msra.mxu0 0.0
    %383 = vmatpush.msra.mxu0 0.0
    %384 = vmatpush.msra.mxu0 0.0
    %385 = vmatpush.msra.mxu0 0.0
    %386 = vmatpush.msra.mxu0 0.0
    %387 = vmatpush.msra.mxu0 0.0
    %388 = vmatpush.msra.mxu0 0.0
    %389 = vmatpush.msra.mxu0 0.0
    %390 = vmatpush.msra.mxu0 0.0
    %391 = vmatpush.msra.mxu0 %v374
    %392 = vmatmul.f32.gmra.mxu0 %v365
    %v393 = vpop.f32.mrf.mxu0
    %v394 = vadd.f32 %v362, %v393
    %395 = vmatmul.f32.gmra.mxu0 %v368
    %v396 = vpop.f32.mrf.mxu0
    %v397 = vadd.f32 %v362, %v396
    %398 = vmatmul.f32.gmra.mxu0 %v371
    %v399 = vpop.f32.mrf.mxu0
    %v400 = vadd.f32 %v362, %v399
    %401 = vdwg.mxu0
    %vm402 = vcmp.ge.f32.partialorder %v394, 0.0
    %vm403 = vcmp.ge.f32.partialorder %v397, 0.0
    %vm404 = vcmp.ge.f32.partialorder %v400, 0.0
    %v405 = vmul.f32 %v315, %v394
    %v406 = vmul.f32 %v315, %v397
    %v407 = vmul.f32 %v315, %v400
    %v408 = vsel %vm402, %v394, %v405
    %v409 = vsel %vm403, %v397, %v406
    %v410 = vsel %vm404, %v400, %v407
    %v411 = vld [vmem:[%s9] sm:$0xff]
    %vm412 = vcmask 64512
    %v414 = vsel %vm412, %v411, 0
    %416 = vmatpush.msra.mxu0 0.0
    %417 = vmatpush.msra.mxu0 0.0
    %418 = vmatpush.msra.mxu0 0.0
    %419 = vmatpush.msra.mxu0 0.0
    %420 = vmatpush.msra.mxu0 0.0
    %421 = vmatpush.msra.mxu0 0.0
    %422 = vmatpush.msra.mxu0 0.0
    %423 = vmatpush.msra.mxu0 0.0
    %424 = vmatpush.msra.mxu0 0.0
    %425 = vmatpush.msra.mxu0 0.0
    %426 = vmatpush.msra.mxu0 0.0
    %427 = vmatpush.msra.mxu0 0.0
    %428 = vmatpush.msra.mxu0 0.0
    %429 = vmatpush.msra.mxu0 0.0
    %430 = vmatpush.msra.mxu0 0.0
    %431 = vmatpush.msra.mxu0 %v242
    %432 = vmatmul.f32.gmra.mxu0 %v414
    %v433 = vpop.f32.mrf.mxu0
    %v434 = vadd.f32 0.0, %v433
    %435 = vdwg.mxu0
    %v436 = vld [vmem:[#allocation3] sm:$0xf]
    %v437 = vld [vmem:[%s17] sm:$0x1]
    %v439 = vperm.slane %v437, 0
    %v442 = vsel %vm279, %v434, 0
    %v445 = vsel %vm286, %v436, 0
    %447 = vmatpush.msra.mxu0 0.0
    %448 = vmatpush.msra.mxu0 0.0
    %449 = vmatpush.msra.mxu0 0.0
    %450 = vmatpush.msra.mxu0 0.0
    %451 = vmatpush.msra.mxu0 0.0
    %452 = vmatpush.msra.mxu0 0.0
    %453 = vmatpush.msra.mxu0 0.0
    %454 = vmatpush.msra.mxu0 0.0
    %455 = vmatpush.msra.mxu0 0.0
    %456 = vmatpush.msra.mxu0 0.0
    %457 = vmatpush.msra.mxu0 0.0
    %458 = vmatpush.msra.mxu0 0.0
    %459 = vmatpush.msra.mxu0 0.0
    %460 = vmatpush.msra.mxu0 0.0
    %461 = vmatpush.msra.mxu0 0.0
    %462 = vmatpush.msra.mxu0 %v445
    %463 = vmatmul.f32.gmra.mxu0 %v442
    %v464 = vpop.f32.mrf.mxu0
    %v465 = vadd.f32 %v439, %v464
    %466 = vdwg.mxu0
    %vm467 = vcmp.ge.f32.partialorder %v465, 0.0
    %v468 = vmul.f32 %v315, %v465
    %v469 = vsel %vm467, %v465, %v468
    %v470 = vld [vmem:[%s11] sm:$0xff]
    %v471 = vld [vmem:[%s11 + $0x8] sm:$0xff]
    %v472 = vld [vmem:[%s11 + $0x10] sm:$0xff]
    %v474 = vsel %vm412, %v470, 0
    %v477 = vsel %vm412, %v471, 0
    %v480 = vsel %vm412, %v472, 0
    %482 = vmatpush.msra.mxu0 0.0
    %483 = vmatpush.msra.mxu0 0.0
    %484 = vmatpush.msra.mxu0 0.0
    %485 = vmatpush.msra.mxu0 0.0
    %486 = vmatpush.msra.mxu0 0.0
    %487 = vmatpush.msra.mxu0 0.0
    %488 = vmatpush.msra.mxu0 0.0
    %489 = vmatpush.msra.mxu0 0.0
    %490 = vmatpush.msra.mxu0 0.0
    %491 = vmatpush.msra.mxu0 0.0
    %492 = vmatpush.msra.mxu0 0.0
    %493 = vmatpush.msra.mxu0 0.0
    %494 = vmatpush.msra.mxu0 0.0
    %495 = vmatpush.msra.mxu0 0.0
    %496 = vmatpush.msra.mxu0 0.0
    %497 = vmatpush.msra.mxu0 %v469
    %498 = vmatmul.f32.gmra.mxu0 %v474
    %v499 = vpop.f32.mrf.mxu0
    %v500 = vadd.f32 0.0, %v499
    %501 = vmatmul.f32.gmra.mxu0 %v477
    %v502 = vpop.f32.mrf.mxu0
    %v503 = vadd.f32 0.0, %v502
    %504 = vmatmul.f32.gmra.mxu0 %v480
    %v505 = vpop.f32.mrf.mxu0
    %v506 = vadd.f32 0.0, %v505
    %507 = vdwg.mxu0
    %v508 = vld [vmem:[%s18] sm:$0xff]
    %v509 = vld [vmem:[%s19] sm:$0x1]
    %v511 = vperm.slane %v509, 0
    %v514 = vsel %vm412, %v500, 0
    %v517 = vsel %vm412, %v503, 0
    %v520 = vsel %vm412, %v506, 0
    %522 = vmatpush.msra.mxu0 0.0
    %523 = vmatpush.msra.mxu0 0.0
    %524 = vmatpush.msra.mxu0 0.0
    %525 = vmatpush.msra.mxu0 0.0
    %526 = vmatpush.msra.mxu0 0.0
    %527 = vmatpush.msra.mxu0 0.0
    %528 = vmatpush.msra.mxu0 0.0
    %529 = vmatpush.msra.mxu0 0.0
    %530 = vmatpush.msra.mxu0 0.0
    %531 = vmatpush.msra.mxu0 0.0
    %532 = vmatpush.msra.mxu0 0.0
    %533 = vmatpush.msra.mxu0 0.0
    %534 = vmatpush.msra.mxu0 0.0
    %535 = vmatpush.msra.mxu0 0.0
    %536 = vmatpush.msra.mxu0 0.0
    %537 = vmatpush.msra.mxu0 %v508
    %538 = vmatmul.f32.gmra.mxu0 %v514
    %v539 = vpop.f32.mrf.mxu0
    %v540 = vadd.f32 %v511, %v539
    %541 = vmatmul.f32.gmra.mxu0 %v517
    %v542 = vpop.f32.mrf.mxu0
    %v543 = vadd.f32 %v511, %v542
    %544 = vmatmul.f32.gmra.mxu0 %v520
    %v545 = vpop.f32.mrf.mxu0
    %v546 = vadd.f32 %v511, %v545
    %547 = vdwg.mxu0
    %v548 = vld [vmem:[%s10] sm:$0xff]
    %v549 = vld [vmem:[%s10 + $0x8] sm:$0xff]
    %v550 = vadd.f32 %v408, %v540
    %v551 = vadd.f32 %v409, %v543
    %v552 = vadd.f32 %v410, %v546
    %v554 = vsel %vm323, %v548, 0
    %v557 = vsel %vm323, %v549, 0
    %559 = vmatpush.msra.mxu0 0.0
    %560 = vmatpush.msra.mxu0 0.0
    %561 = vmatpush.msra.mxu0 0.0
    %562 = vmatpush.msra.mxu0 0.0
    %563 = vmatpush.msra.mxu0 0.0
    %564 = vmatpush.msra.mxu0 0.0
    %565 = vmatpush.msra.mxu0 0.0
    %566 = vmatpush.msra.mxu0 0.0
    %567 = vmatpush.msra.mxu0 0.0
    %568 = vmatpush.msra.mxu0 0.0
    %569 = vmatpush.msra.mxu0 0.0
    %570 = vmatpush.msra.mxu0 0.0
    %571 = vmatpush.msra.mxu0 0.0
    %572 = vmatpush.msra.mxu0 %v552
    %573 = vmatpush.msra.mxu0 %v551
    %574 = vmatpush.msra.mxu0 %v550
    %575 = vmatmul.f32.gmra.mxu0 %v554
    %v576 = vpop.f32.mrf.mxu0
    %v577 = vadd.f32 0.0, %v576
    %578 = vmatmul.f32.gmra.mxu0 %v557
    %v579 = vpop.f32.mrf.mxu0
    %v580 = vadd.f32 0.0, %v579
    %581 = vdwg.mxu0
    %v582 = vadd.f32 %v318, %v577
    %v583 = vadd.f32 %v319, %v580
    %v584 = vmul.f32 %v582, 0.33333334
    %v585 = vmul.f32 %v583, 0.33333334
    %586 = vst.msk [vmem:[%s20] sm:$0xff] %vm412, %v584
    %587 = vst.msk [vmem:[%s20 + $0x8] sm:$0xff] %vm412, %v585
    // Predicated region
    $region86: #{tpu_custom_call.1} parent=1 // pred_check
      _
    $region87: #{tpu_custom_call.1} parent=1 // pred_check_branch
      %589 = sbr.rel (0) target = $region89
    $region88: #{tpu_custom_call.1} parent=1 // pred_region
      _
    $region89: #{tpu_custom_call.1} parent=1 // pred_fallthru
      _
    // Predicated region
    $region90: #{tpu_custom_call.1} parent=1 // pred_check
      _
    $region91: #{tpu_custom_call.1} parent=1 // pred_check_branch
      %591 = sbr.rel (0) target = $region93
    $region92: #{tpu_custom_call.1} parent=1 // pred_region
      _
    $region93: #{tpu_custom_call.1} parent=1 // pred_fallthru
      _
    %592 = vsyncpa [#allocation4], 1

</llo_original>
